<compile_context>
chip_gen: v6e
topology: v6e:2x2x1
jax: 0.10.0
libtpu: 0.0.40
codegen_flags: <defaults>
</compile_context>

<pallas_src>
import jax
import jax.numpy as jnp
from jax import lax
from jax.experimental import pallas as pl
from jax.experimental.pallas import tpu as pltpu

EPS = 1e-5
_LANE = 128
_SUBLANE = 8


def _round_up(x, m):
    return (x + m - 1) // m * m


def _vmem_budget_bytes():
    """(tile data budget, scoped vmem limit) per TPU generation."""
    try:
        kind = jax.devices()[0].device_kind.lower()
    except Exception:
        kind = ""
    if "v5" in kind or "v6" in kind:
        # 128 MiB physical VMEM parts: raise the (16/32 MiB) default scoped limit.
        return 88 << 20, 104 << 20
    # Conservative default that also fits v7x's 64 MiB per-TensorCore VMEM.
    return 36 << 20, 48 << 20


# ---------------------------------------------------------------------------
# Fused path: whole batch resident per feature tile (reads x once).
# ---------------------------------------------------------------------------
def _fused_kernel(inv_count_ref, x_ref, mask_ref, gamma_ref, beta_ref, o_ref):
    # inv_count_ref : SMEM (1,)  f32   1 / max(#masked rows, 1), precomputed
    # x_ref         : VMEM (N, tf)
    # mask_ref      : VMEM (N, 1) f32  0/1 mask, precomputed in the wrapper
    # gamma_ref     : VMEM (1, tf)
    # beta_ref      : VMEM (1, tf)
    # o_ref         : VMEM (N, tf)
    inv_count = inv_count_ref[0]
    x = x_ref[...].astype(jnp.float32)
    m = mask_ref[...]                                   # (N, 1) in {0, 1}

    # Single pass over the tile: masked sum and sum-of-squares.
    xm = x * m                                          # m in {0,1} -> xm*xm == x*x*m
    s = jnp.sum(xm, axis=0, keepdims=True)              # (1, tf)
    sq = jnp.sum(xm * xm, axis=0, keepdims=True)        # (1, tf)

    mean = s * inv_count
    # One-pass biased variance (f32 accumulation; clamp for tiny negative
    # round-off from cancellation).
    var = jnp.maximum(sq * inv_count - mean * mean, 0.0)
    inv_std = lax.rsqrt(var + EPS)                      # EUP, effectively free

    # Fold the affine into one scale + one shift -> y = (x*scale + shift) * m
    scale = inv_std * gamma_ref[...].astype(jnp.float32)        # (1, tf)
    shift = beta_ref[...].astype(jnp.float32) - mean * scale    # (1, tf)
    o_ref[...] = ((x * scale + shift) * m).astype(o_ref.dtype)


def _masked_bn_fused(x, mask01, inv_count, gamma2d, beta2d, tile_f, vmem_limit):
    N, Fp = x.shape
    nf = Fp // tile_f
    return pl.pallas_call(
        _fused_kernel,
        out_shape=jax.ShapeDtypeStruct((N, Fp), x.dtype),
        grid=(nf,),
        in_specs=[
            pl.BlockSpec(memory_space=pltpu.MemorySpace.SMEM),   # inv_count
            pl.BlockSpec((N, tile_f), lambda j: (0, j)),         # x tile
            pl.BlockSpec((N, 1), lambda j: (0, 0)),              # mask (replicated)
            pl.BlockSpec((1, tile_f), lambda j: (0, j)),         # gamma
            pl.BlockSpec((1, tile_f), lambda j: (0, j)),         # beta
        ],
        out_specs=pl.BlockSpec((N, tile_f), lambda j: (0, j)),
        compiler_params=pltpu.CompilerParams(
            dimension_semantics=("parallel",),
            vmem_limit_bytes=vmem_limit,
        ),
    )(inv_count, x, mask01, gamma2d, beta2d)


# ---------------------------------------------------------------------------
# Batch-tiled path for large N: stats kernel (accumulate over batch tiles),
# tiny F-length JAX epilogue, then apply kernel.
# ---------------------------------------------------------------------------
def _stats_kernel(x_ref, mask_ref, sum_ref, sumsq_ref):
    @pl.when(pl.program_id(1) == 0)
    def _():
        sum_ref[...] = jnp.zeros_like(sum_ref)
        sumsq_ref[...] = jnp.zeros_like(sumsq_ref)

    x = x_ref[...].astype(jnp.float32)
    xm = x * mask_ref[...]
    sum_ref[...] += jnp.sum(xm, axis=0, keepdims=True)
    sumsq_ref[...] += jnp.sum(xm * xm, axis=0, keepdims=True)


def _apply_kernel(x_ref, mask_ref, scale_ref, shift_ref, o_ref):
    x = x_ref[...].astype(jnp.float32)
    y = x * scale_ref[...] + shift_ref[...]
    o_ref[...] = (y * mask_ref[...]).astype(o_ref.dtype)


def _masked_bn_batch_tiled(x, mask01, inv_count, gamma, beta,
                           data_budget, vmem_limit, tile_n=None, tile_f=None):
    N, F = x.shape
    if tile_f is None:
        # Lane-dense tile, but never pad F past the next 128 multiple.
        tile_f = min(512, _round_up(F, _LANE))
    if tile_n is None:
        # Double-buffered x + out tiles dominate VMEM: ~4 * tn * tf * 4 bytes.
        tile_n = (data_budget // (4 * tile_f * 4)) // _SUBLANE * _SUBLANE
        tile_n = max(_SUBLANE, min(4096, tile_n))

    Fp = _round_up(F, tile_f)
    Np = _round_up(N, tile_n)

    xp = jnp.pad(x, ((0, Np - N), (0, Fp - F)))
    mp = jnp.pad(mask01, ((0, Np - N), (0, 0)))        # padded rows: mask = 0
    gp = jnp.pad(gamma, (0, Fp - F)).reshape(1, Fp)
    bp = jnp.pad(beta, (0, Fp - F)).reshape(1, Fp)

    nf, nn = Fp // tile_f, Np // tile_n

    # Pass 1: masked per-feature sum and sum-of-squares (accumulate over N,
    # reduction axis last in the grid).
    sums, sumsqs = pl.pallas_call(
        _stats_kernel,
        out_shape=(jax.ShapeDtypeStruct((1, Fp), jnp.float32),
                   jax.ShapeDtypeStruct((1, Fp), jnp.float32)),
        grid=(nf, nn),
        in_specs=[
            pl.BlockSpec((tile_n, tile_f), lambda i, k: (k, i)),
            pl.BlockSpec((tile_n, 1), lambda i, k: (k, 0)),
        ],
        out_specs=(pl.BlockSpec((1, tile_f), lambda i, k: (0, i)),
                   pl.BlockSpec((1, tile_f), lambda i, k: (0, i))),
        compiler_params=pltpu.CompilerParams(
            dimension_semantics=("parallel", "arbitrary"),
            vmem_limit_bytes=vmem_limit,
        ),
    )(xp, mp)

    # Tiny F-length epilogue in plain JAX: fold stats + affine into scale/shift.
    mean = sums * inv_count
    var = jnp.maximum(sumsqs * inv_count - mean * mean, 0.0)
    scale = gp.astype(jnp.float32) * lax.rsqrt(var + EPS)
    shift = bp.astype(jnp.float32) - mean * scale

    # Pass 2: y = (x * scale + shift) * mask, fully parallel grid.
    out = pl.pallas_call(
        _apply_kernel,
        out_shape=jax.ShapeDtypeStruct((Np, Fp), x.dtype),
        grid=(nf, nn),
        in_specs=[
            pl.BlockSpec((tile_n, tile_f), lambda i, k: (k, i)),
            pl.BlockSpec((tile_n, 1), lambda i, k: (k, 0)),
            pl.BlockSpec((1, tile_f), lambda i, k: (0, i)),
            pl.BlockSpec((1, tile_f), lambda i, k: (0, i)),
        ],
        out_specs=pl.BlockSpec((tile_n, tile_f), lambda i, k: (k, i)),
        compiler_params=pltpu.CompilerParams(
            dimension_semantics=("parallel", "parallel"),
            vmem_limit_bytes=vmem_limit,
        ),
    )(xp, mp, scale, shift)

    return out[:N, :F]


# ---------------------------------------------------------------------------
# Public wrapper
# ---------------------------------------------------------------------------
def masked_batch_norm_1d(x, mask, gamma, beta):
    """x: (N, F) float, mask: (N,) any numeric, gamma/beta: (F,)."""
    N, F = x.shape
    assert mask.shape == (N,)
    assert gamma.shape == (F,) and beta.shape == (F,)

    data_budget, vmem_limit = _vmem_budget_bytes()

    # Hoisted out of the kernel: 0/1 float mask, masked-row count, 1/count.
    mask01 = (mask > 0).astype(jnp.float32).reshape(N, 1)
    count = jnp.maximum(jnp.sum(mask01), 1.0)
    inv_count = (1.0 / count).reshape(1).astype(jnp.float32)

    bytes_per_el = 4  # stats / normalization done in f32
    fp_lane = _round_up(F, _LANE)

    # Largest feature tile (multiple of 128 lanes) s.t. the double-buffered
    # x-tile + out-tile stay under the per-generation VMEM data budget.
    max_tf = data_budget // (4 * max(N, 1) * bytes_per_el)
    max_tf = (max_tf // _LANE) * _LANE

    if max_tf >= _LANE:
        tf = min(fp_lane, max_tf)
        # Keep >= 2 feature blocks so the 'parallel' grid axis can be sharded
        # across both TensorCores on v7x-class chips.
        if fp_lane >= 2 * _LANE:
            tf = min(tf, max(_LANE, (fp_lane // 2) // _LANE * _LANE))
        Fp = _round_up(F, tf)
        xp = jnp.pad(x, ((0, 0), (0, Fp - F))) if Fp != F else x
        gp = jnp.pad(gamma, (0, Fp - F)).reshape(1, Fp)
        bp = jnp.pad(beta, (0, Fp - F)).reshape(1, Fp)
        out = _masked_bn_fused(xp, mask01, inv_count, gp, bp, tf, vmem_limit)
        return out[:, :F] if Fp != F else out

    # N too large to keep the whole batch resident per feature tile.
    return _masked_bn_batch_tiled(x, mask01, inv_count, gamma, beta,
                                  data_budget, vmem_limit)


def masked_batch_norm_1d_ref(x, mask, gamma, beta):
    """Pure-JAX reference matching the PyTorch module (two-pass stats)."""
    m = (mask > 0).astype(jnp.float32)[:, None]
    count = jnp.maximum(jnp.sum(m), 1.0)
    mean = jnp.sum(x * m, axis=0, keepdims=True) / count
    var = jnp.sum(((x - mean) * m) ** 2, axis=0, keepdims=True) / count
    y = gamma[None, :] * (x - mean) / jnp.sqrt(var + EPS) + beta[None, :]
    return y * m


if __name__ == "__main__":
    key = jax.random.PRNGKey(0)
    kx, km, kg, kb = jax.random.split(key, 4)

    # Small shapes consistent with the module: batch of 8 rows, feature_n=256.
    N, F = 8, 256
    x = jax.random.normal(kx, (N, F), dtype=jnp.float32)
    mask = (jax.random.uniform(km, (N,)) > 0.3).astype(jnp.int32)
    gamma = 1.0 + 0.1 * jax.random.normal(kg, (F,), dtype=jnp.float32)
    beta = 0.1 * jax.random.normal(kb, (F,), dtype=jnp.float32)

    fused = jax.jit(masked_batch_norm_1d)   # shape-static branching -> jit-safe
    y = jax.block_until_ready(fused(x, mask, gamma, beta))
    y_ref = masked_batch_norm_1d_ref(x, mask, gamma, beta)
    assert jnp.allclose(y, y_ref, atol=1e-4, rtol=1e-4), "fused path mismatch"

    # Also exercise the batch-tiled (large-N) path at small shapes by forcing
    # tiny tiles; covers padding on both the batch and feature axes.
    N2, F2 = 40, 200
    x2 = jax.random.normal(kx, (N2, F2), dtype=jnp.float32)
    mask2 = (jax.random.uniform(km, (N2,)) > 0.4).astype(jnp.int32)
    g2 = jnp.ones((F2,), jnp.float32)
    b2 = jnp.zeros((F2,), jnp.float32)
    m01 = (mask2 > 0).astype(jnp.float32).reshape(N2, 1)
    invc = (1.0 / jnp.maximum(jnp.sum(m01), 1.0)).reshape(1).astype(jnp.float32)
    y2 = jax.block_until_ready(
        _masked_bn_batch_tiled(x2, m01, invc, g2, b2,
                               data_budget=36 << 20, vmem_limit=48 << 20,
                               tile_n=16, tile_f=128))
    y2_ref = masked_batch_norm_1d_ref(x2, mask2, g2, b2)
    assert jnp.allclose(y2, y2_ref, atol=1e-4, rtol=1e-4), "tiled path mismatch"

    print("KERNEL_OK")
</pallas_src>

<mosaic_0001>
module attributes {stable_mosaic.version = 11 : i64} {
  func.func @_fused_kernel(%arg0: i32, %arg1: memref<1xf32, #tpu.memory_space<smem>>, %arg2: memref<8x128xf32, #tpu.memory_space<vmem>>, %arg3: memref<8x1xf32, #tpu.memory_space<vmem>>, %arg4: memref<1x128xf32, #tpu.memory_space<vmem>>, %arg5: memref<1x128xf32, #tpu.memory_space<vmem>>, %arg6: memref<8x128xf32, #tpu.memory_space<vmem>>) attributes {dimension_semantics = [#tpu.dimension_semantics<parallel>], iteration_bounds = array<i64: 2>, scalar_prefetch = 0 : i64, scratch_operands = 0 : i64, tpu.core_type = #tpu.core_type<tc>, window_params = [{transform_indices = @transform_0, window_bounds = array<i64: 1>}, {transform_indices = @transform_1, window_bounds = array<i64: 8, 128>}, {pipeline_mode = #tpu.pipeline_mode<synchronous>, transform_indices = @transform_2, window_bounds = array<i64: 8, 1>}, {transform_indices = @transform_3, window_bounds = array<i64: 1, 128>}, {transform_indices = @transform_4, window_bounds = array<i64: 1, 128>}, {transform_indices = @transform_5, window_bounds = array<i64: 8, 128>}]} {
    %c0 = arith.constant 0 : index
    %0 = memref.load %arg1[%c0] : memref<1xf32, #tpu.memory_space<smem>>
    %c0_0 = arith.constant 0 : index
    %c0_1 = arith.constant 0 : index
    %1 = vector.load %arg2[%c0_0, %c0_1] : memref<8x128xf32, #tpu.memory_space<vmem>>, vector<8x128xf32>
    %c0_2 = arith.constant 0 : index
    %c0_3 = arith.constant 0 : index
    %2 = vector.load %arg3[%c0_2, %c0_3] : memref<8x1xf32, #tpu.memory_space<vmem>>, vector<8x1xf32>
    %3 = vector.broadcast %2 : vector<8x1xf32> to vector<8x128xf32>
    %4 = arith.mulf %1, %3 : vector<8x128xf32>
    %cst = arith.constant dense<0.000000e+00> : vector<128xf32>
    %5 = vector.multi_reduction <add>, %4, %cst [0] : vector<8x128xf32> to vector<128xf32>
    %6 = vector.shape_cast %5 : vector<128xf32> to vector<1x128xf32>
    %7 = arith.mulf %4, %4 : vector<8x128xf32>
    %cst_4 = arith.constant dense<0.000000e+00> : vector<128xf32>
    %8 = vector.multi_reduction <add>, %7, %cst_4 [0] : vector<8x128xf32> to vector<128xf32>
    %9 = vector.shape_cast %8 : vector<128xf32> to vector<1x128xf32>
    %10 = vector.broadcast %0 : f32 to vector<1x128xf32>
    %11 = arith.mulf %6, %10 : vector<1x128xf32>
    %12 = vector.broadcast %0 : f32 to vector<1x128xf32>
    %13 = arith.mulf %9, %12 : vector<1x128xf32>
    %14 = arith.mulf %11, %11 : vector<1x128xf32>
    %15 = arith.subf %13, %14 : vector<1x128xf32>
    %cst_5 = arith.constant 0.000000e+00 : f32
    %16 = vector.broadcast %cst_5 : f32 to vector<1x128xf32>
    %17 = arith.maximumf %15, %16 : vector<1x128xf32>
    %cst_6 = arith.constant 9.99999974E-6 : f32
    %18 = vector.broadcast %cst_6 : f32 to vector<1x128xf32>
    %19 = arith.addf %17, %18 : vector<1x128xf32>
    %20 = math.rsqrt %19 : vector<1x128xf32>
    %c0_7 = arith.constant 0 : index
    %c0_8 = arith.constant 0 : index
    %21 = vector.load %arg4[%c0_7, %c0_8] : memref<1x128xf32, #tpu.memory_space<vmem>>, vector<1x128xf32>
    %22 = arith.mulf %20, %21 : vector<1x128xf32>
    %c0_9 = arith.constant 0 : index
    %c0_10 = arith.constant 0 : index
    %23 = vector.load %arg5[%c0_9, %c0_10] : memref<1x128xf32, #tpu.memory_space<vmem>>, vector<1x128xf32>
    %24 = arith.mulf %11, %22 : vector<1x128xf32>
    %25 = arith.subf %23, %24 : vector<1x128xf32>
    %26 = vector.broadcast %22 : vector<1x128xf32> to vector<8x128xf32>
    %27 = arith.mulf %1, %26 : vector<8x128xf32>
    %28 = vector.broadcast %25 : vector<1x128xf32> to vector<8x128xf32>
    %29 = arith.addf %27, %28 : vector<8x128xf32>
    %30 = vector.broadcast %2 : vector<8x1xf32> to vector<8x128xf32>
    %31 = arith.mulf %29, %30 : vector<8x128xf32>
    %c0_11 = arith.constant 0 : index
    %c0_12 = arith.constant 0 : index
    %32 = vector.load %arg6[%c0_11, %c0_12] : memref<8x128xf32, #tpu.memory_space<vmem>>, vector<8x128xf32>
    tpu.vector_store %arg6[%c0_11, %c0_12], %31 {strides = array<i32>} : memref<8x128xf32, #tpu.memory_space<vmem>>, vector<8x128xf32>,
    return
  }
  func.func @transform_0(%arg0: i32) -> i32 {
    %c0_i32 = arith.constant 0 : i32
    %c0_i32_0 = arith.constant 0 : i32
    return %c0_i32 : i32
  }
  func.func @transform_1(%arg0: i32) -> (i32, i32) {
    %c0_i32 = arith.constant 0 : i32
    %c0_i32_0 = arith.constant 0 : i32
    return %c0_i32, %arg0 : i32, i32
  }
  func.func @transform_2(%arg0: i32) -> (i32, i32) {
    %c0_i32 = arith.constant 0 : i32
    %c0_i32_0 = arith.constant 0 : i32
    %c0_i32_1 = arith.constant 0 : i32
    return %c0_i32, %c0_i32_0 : i32, i32
  }
  func.func @transform_3(%arg0: i32) -> (i32, i32) {
    %c0_i32 = arith.constant 0 : i32
    %c0_i32_0 = arith.constant 0 : i32
    return %c0_i32, %arg0 : i32, i32
  }
  func.func @transform_4(%arg0: i32) -> (i32, i32) {
    %c0_i32 = arith.constant 0 : i32
    %c0_i32_0 = arith.constant 0 : i32
    return %c0_i32, %arg0 : i32, i32
  }
  func.func @transform_5(%arg0: i32) -> (i32, i32) {
    %c0_i32 = arith.constant 0 : i32
    %c0_i32_0 = arith.constant 0 : i32
    return %c0_i32, %arg0 : i32, i32
  }
}

</mosaic_0001>

<llo_original>
// kernel: masked_batch_norm_1d.1
$region0: #{masked_batch_norm_1d.1}
  #allocation0 [shape = 'u32[]', space=smem, size = 0x4, offset = 0x4, fixed_abs, tag = 'smem constant byte address 0x4 - core index']
  #allocation1 [shape = 'u32[144,128]{1,0:T(1,128)}', space=vmem, size = 0x12000, scoped, tag = 'internal scratch']
  #allocation2 [shape = 'f32[1]{0:T(128)S(6)}', space=smem, size = 0x200, scoped, tag = 'scoped memory for masked_batch_norm_1d.1']
  %s0 = inlined_call_operand.<no memory space> [shape: f32[1], index: 0, kind: input, shape index: {}]
  %s1 = inlined_call_operand.vmem [shape: f32[8,256], index: 1, kind: input, shape index: {}]
  %s2 = inlined_call_operand.vmem [shape: f32[8,1], index: 2, kind: input, shape index: {}]
  %s3 = inlined_call_operand.vmem [shape: f32[1,256], index: 3, kind: input, shape index: {}]
  %s4 = inlined_call_operand.vmem [shape: f32[1,256], index: 4, kind: input, shape index: {}]
  %s5 = inlined_call_operand.hbm [shape: f32[8,256], index: 5, kind: output, shape index: {}]
  %s6 = sld [smem:[#allocation0]]
  $region53: #{masked_batch_norm_1d.1} parent=0
    _
  %s8 = ssub.s32 1, %s6
  %s9 = scalar_select 0, %s8, %s6
  %10 = sst [smem:[#allocation2]] %s0
  $region1: #{masked_batch_norm_1d.1} parent=0
    #allocation3 [shape = 'u8[8192]{0}', space=vmem, size = 0x2000, scoped, tag = 'output window, operand 0']
    #allocation4 [shape = 's32[2]{0}', space=sflag, size = 0x8, scoped, tag = 'scoped memory for masked_batch_norm_1d.1']
    %11 = vsyncpa [#allocation4], 0
    %s12 = scalar_lea.sflag [#allocation4], 1
    %13 = vsyncpa %s12, 0
    loop: start=0, step=1, limit=4
    $region2: #{masked_batch_norm_1d.1} parent=1 // loop_pre_header
      _
    $region3: #{masked_batch_norm_1d.1} parent=1 // loop_header
      %s15 = sphi 0, %s19
      %p16 = scmp.ge.s32.totalorder %s15, 4
      %s23 = sphi 0, %s23
      %s25 = sphi 0, %s23
      %s26 = sphi 0, %s25
      %s40 = sphi 0, %s26
      %s46 = sphi 0, %s48
      %s49 = sphi 0, %s46
      %s50 = sphi 0, %s49
      %s66 = sphi 0, %s50
      %s70 = sphi 0, %s70
      %s72 = sphi 0, %s70
      %s73 = sphi 0, %s72
      %s87 = sphi 0, %s73
      %s93 = sphi 0, %s95
      %s96 = sphi 0, %s93
      %s97 = sphi 0, %s96
      %s113 = sphi 0, %s97
      %s119 = sphi 0, %s121
      %s122 = sphi 0, %s119
      %s123 = sphi 0, %s122
      %s139 = sphi 0, %s123
      %s145 = sphi 0, %s147
      %s148 = sphi 0, %s145
      %s149 = sphi 0, %s148
      %s165 = sphi 0, %s149
    $region4: #{masked_batch_norm_1d.1} parent=1 // loop_header_branch
      %18 = sbr.rel (%p16) target = $region8
    $region5: #{masked_batch_norm_1d.1} parent=1 // loop_body
      %s20 = ssub.s32 %s15, 1
      %s21 = ssub.s32 %s15, 2
      %s22 = sadd.s32 %s15, 1
      %s24 = sadd.s32 %s23, 1
      %p27 = scmp.eq.s32.totalorder %s15, 1
      %p28 = scmp.ne.s32.totalorder %s23, %s25
      %p29 = scmp.eq.s32.totalorder %s15, 0
      %p30 = por %p28, %p29
      %p31 = scmp.ne.s32.totalorder %s23, %s25
      %p32 = scmp.eq.s32.totalorder %s20, 1
      %p33 = por %p31, %p32
      %p34 = scmp.ne.s32.totalorder %s25, %s26
      %p35 = scmp.eq.s32.totalorder %s20, 0
      %p36 = por %p34, %p35
      %p37 = scmp.ne.s32.totalorder %s25, %s26
      %p38 = scmp.eq.s32.totalorder %s21, 1
      %p39 = por %p37, %p38
      %p41 = scmp.ne.s32.totalorder %s26, %s40
      %p42 = scmp.eq.s32.totalorder %s21, 0
      %p43 = por %p41, %p42
      %s44 = ssub.s32 %s15, %s22
      %p45 = scmp.eq.s32.totalorder %s44, 0
      %s47 = sadd.s32 %s46, 1
      %s48 = scalar_select %p45, %s46, %s47
      %p51 = pneg %p45
      %p52 = scmp.eq.s32.totalorder %s15, 1
      %p53 = por %p51, %p52
      %p54 = scmp.ne.s32.totalorder %s46, %s49
      %p55 = scmp.eq.s32.totalorder %s15, 0
      %p56 = por %p54, %p55
      %p57 = scmp.ne.s32.totalorder %s46, %s49
      %p58 = scmp.eq.s32.totalorder %s20, 1
      %p59 = por %p57, %p58
      %p60 = scmp.ne.s32.totalorder %s49, %s50
      %p61 = scmp.eq.s32.totalorder %s20, 0
      %p62 = por %p60, %p61
      %p63 = scmp.ne.s32.totalorder %s49, %s50
      %p64 = scmp.eq.s32.totalorder %s21, 1
      %p65 = por %p63, %p64
      %p67 = scmp.ne.s32.totalorder %s50, %s66
      %p68 = scmp.eq.s32.totalorder %s21, 0
      %p69 = por %p67, %p68
      %s71 = sadd.s32 %s70, 1
      %p74 = scmp.eq.s32.totalorder %s15, 1
      %p75 = scmp.ne.s32.totalorder %s70, %s72
      %p76 = scmp.eq.s32.totalorder %s15, 0
      %p77 = por %p75, %p76
      %p78 = scmp.ne.s32.totalorder %s70, %s72
      %p79 = scmp.eq.s32.totalorder %s20, 1
      %p80 = por %p78, %p79
      %p81 = scmp.ne.s32.totalorder %s72, %s73
      %p82 = scmp.eq.s32.totalorder %s20, 0
      %p83 = por %p81, %p82
      %p84 = scmp.ne.s32.totalorder %s72, %s73
      %p85 = scmp.eq.s32.totalorder %s21, 1
      %p86 = por %p84, %p85
      %p88 = scmp.ne.s32.totalorder %s73, %s87
      %p89 = scmp.eq.s32.totalorder %s21, 0
      %p90 = por %p88, %p89
      %s91 = ssub.s32 %s15, %s22
      %p92 = scmp.eq.s32.totalorder %s91, 0
      %s94 = sadd.s32 %s93, 1
      %s95 = scalar_select %p92, %s93, %s94
      %p98 = pneg %p92
      %p99 = scmp.eq.s32.totalorder %s15, 1
      %p100 = por %p98, %p99
      %p101 = scmp.ne.s32.totalorder %s93, %s96
      %p102 = scmp.eq.s32.totalorder %s15, 0
      %p103 = por %p101, %p102
      %p104 = scmp.ne.s32.totalorder %s93, %s96
      %p105 = scmp.eq.s32.totalorder %s20, 1
      %p106 = por %p104, %p105
      %p107 = scmp.ne.s32.totalorder %s96, %s97
      %p108 = scmp.eq.s32.totalorder %s20, 0
      %p109 = por %p107, %p108
      %p110 = scmp.ne.s32.totalorder %s96, %s97
      %p111 = scmp.eq.s32.totalorder %s21, 1
      %p112 = por %p110, %p111
      %p114 = scmp.ne.s32.totalorder %s97, %s113
      %p115 = scmp.eq.s32.totalorder %s21, 0
      %p116 = por %p114, %p115
      %s117 = ssub.s32 %s15, %s22
      %p118 = scmp.eq.s32.totalorder %s117, 0
      %s120 = sadd.s32 %s119, 1
      %s121 = scalar_select %p118, %s119, %s120
      %p124 = pneg %p118
      %p125 = scmp.eq.s32.totalorder %s15, 1
      %p126 = por %p124, %p125
      %p127 = scmp.ne.s32.totalorder %s119, %s122
      %p128 = scmp.eq.s32.totalorder %s15, 0
      %p129 = por %p127, %p128
      %p130 = scmp.ne.s32.totalorder %s119, %s122
      %p131 = scmp.eq.s32.totalorder %s20, 1
      %p132 = por %p130, %p131
      %p133 = scmp.ne.s32.totalorder %s122, %s123
      %p134 = scmp.eq.s32.totalorder %s20, 0
      %p135 = por %p133, %p134
      %p136 = scmp.ne.s32.totalorder %s122, %s123
      %p137 = scmp.eq.s32.totalorder %s21, 1
      %p138 = por %p136, %p137
      %p140 = scmp.ne.s32.totalorder %s123, %s139
      %p141 = scmp.eq.s32.totalorder %s21, 0
      %p142 = por %p140, %p141
      %s143 = ssub.s32 %s15, %s22
      %p144 = scmp.eq.s32.totalorder %s143, 0
      %s146 = sadd.s32 %s145, 1
      %s147 = scalar_select %p144, %s145, %s146
      %p150 = pneg %p144
      %p151 = scmp.eq.s32.totalorder %s15, 1
      %p152 = por %p150, %p151
      %p153 = scmp.ne.s32.totalorder %s145, %s148
      %p154 = scmp.eq.s32.totalorder %s15, 0
      %p155 = por %p153, %p154
      %p156 = scmp.ne.s32.totalorder %s145, %s148
      %p157 = scmp.eq.s32.totalorder %s20, 1
      %p158 = por %p156, %p157
      %p159 = scmp.ne.s32.totalorder %s148, %s149
      %p160 = scmp.eq.s32.totalorder %s20, 0
      %p161 = por %p159, %p160
      %p162 = scmp.ne.s32.totalorder %s148, %s149
      %p163 = scmp.eq.s32.totalorder %s21, 1
      %p164 = por %p162, %p163
      %p166 = scmp.ne.s32.totalorder %s149, %s165
      %p167 = scmp.eq.s32.totalorder %s21, 0
      %p168 = por %p166, %p167
      %p169 = scmp.le.s32.totalorder 1, %s15
      %p170 = scmp.lt.s32.totalorder %s15, 3
      %p171 = pnand %p169, %p170
      %p172 = pneg %p171
      // Predicated region
      $region9: #{masked_batch_norm_1d.1} parent=5 // pred_check
        _
      $region10: #{masked_batch_norm_1d.1} parent=5 // pred_check_branch
        %174 = sbr.rel (%p171) target = $region12
      $region11: #{masked_batch_norm_1d.1} parent=5 // pred_region
        %s175 = ssub.s32 %s15, 1
        // Predicated region
        $region13: #{masked_batch_norm_1d.1} parent=11 // pred_check
          %p176 = pneg %p36
        $region14: #{masked_batch_norm_1d.1} parent=11 // pred_check_branch
          %178 = sbr.rel (%p176) target = $region16
        $region15: #{masked_batch_norm_1d.1} parent=11 // pred_region
          _
        $region16: #{masked_batch_norm_1d.1} parent=11 // pred_fallthru
          _
        // Predicated region
        $region17: #{masked_batch_norm_1d.1} parent=11 // pred_check
          %p179 = pneg %p83
        $region18: #{masked_batch_norm_1d.1} parent=11 // pred_check_branch
          %181 = sbr.rel (%p179) target = $region20
        $region19: #{masked_batch_norm_1d.1} parent=11 // pred_region
          _
        $region20: #{masked_batch_norm_1d.1} parent=11 // pred_fallthru
          _
      $region12: #{masked_batch_norm_1d.1} parent=5 // pred_fallthru
        _
      %p182 = scmp.lt.s32.totalorder %s15, 2
      // Predicated region
      $region21: #{masked_batch_norm_1d.1} parent=5 // pred_check
        %p183 = pneg %p182
      $region22: #{masked_batch_norm_1d.1} parent=5 // pred_check_branch
        %185 = sbr.rel (%p183) target = $region24
      $region23: #{masked_batch_norm_1d.1} parent=5 // pred_region
        // Predicated region
        $region25: #{masked_batch_norm_1d.1} parent=23 // pred_check
          %p186 = pneg %p56
        $region26: #{masked_batch_norm_1d.1} parent=23 // pred_check_branch
          %188 = sbr.rel (%p186) target = $region28
        $region27: #{masked_batch_norm_1d.1} parent=23 // pred_region
          %p189 = scmp.lt.s32.totalorder %s15, 1
          %s190 = scalar_select %p189, %s15, 1
          %s191 = smul.addr %s190, 8
          %s192 = scalar_lea.vmem %s1, %s191
        $region28: #{masked_batch_norm_1d.1} parent=23 // pred_fallthru
          _
        // Predicated region
        $region29: #{masked_batch_norm_1d.1} parent=23 // pred_check
          %p193 = pneg %p103
        $region30: #{masked_batch_norm_1d.1} parent=23 // pred_check_branch
          %195 = sbr.rel (%p193) target = $region32
        $region31: #{masked_batch_norm_1d.1} parent=23 // pred_region
          %p196 = scmp.lt.s32.totalorder %s15, 1
          %s197 = scalar_select %p196, %s15, 1
          %s198 = scalar_lea.vmem %s3, %s197
        $region32: #{masked_batch_norm_1d.1} parent=23 // pred_fallthru
          _
        // Predicated region
        $region33: #{masked_batch_norm_1d.1} parent=23 // pred_check
          %p199 = pneg %p129
        $region34: #{masked_batch_norm_1d.1} parent=23 // pred_check_branch
          %201 = sbr.rel (%p199) target = $region36
        $region35: #{masked_batch_norm_1d.1} parent=23 // pred_region
          %p202 = scmp.lt.s32.totalorder %s15, 1
          %s203 = scalar_select %p202, %s15, 1
          %s204 = scalar_lea.vmem %s4, %s203
        $region36: #{masked_batch_norm_1d.1} parent=23 // pred_fallthru
          _
      $region24: #{masked_batch_norm_1d.1} parent=5 // pred_fallthru
        _
      %p205 = scmp.le.s32.totalorder 1, %s15
      %p206 = scmp.lt.s32.totalorder %s15, 3
      %p207 = pnand %p205, %p206
      %p208 = pneg %p207
      // Predicated region
      $region37: #{masked_batch_norm_1d.1} parent=5 // pred_check
        _
      $region38: #{masked_batch_norm_1d.1} parent=5 // pred_check_branch
        %210 = sbr.rel (%p207) target = $region40
      $region39: #{masked_batch_norm_1d.1} parent=5 // pred_region
        %s211 = ssub.s32 %s15, 1
        %p212 = pneg %p36
        %p213 = pneg %p33
        %p214 = scmp.lt.s32.totalorder %s20, 1
        %s215 = scalar_select %p214, %s20, 1
        %s216 = smul.addr %s215, 8
        %s217 = scalar_lea.vmem %s1, %s216
        %p218 = pneg %p62
        %p219 = pneg %p59
        %p220 = pneg %p83
        %p221 = pneg %p80
        %p222 = scmp.lt.s32.totalorder %s20, 1
        %s223 = scalar_select %p222, %s20, 1
        %s224 = scalar_lea.vmem %s3, %s223
        %p225 = pneg %p109
        %p226 = pneg %p106
        %p227 = scmp.lt.s32.totalorder %s20, 1
        %s228 = scalar_select %p227, %s20, 1
        %s229 = scalar_lea.vmem %s4, %s228
        %p230 = pneg %p135
        %p231 = pneg %p132
        %p232 = pneg %p161
        %p233 = pneg %p158
        %s234 = sand.u32 %s148, 1
        %s235 = scalar_lea.sflag [#allocation4], %s234
        %s236 = sand.u32 %s148, 1
        %s237 = smul.addr %s236, 8
        %s238 = scalar_lea.vmem [#allocation3], %s237
        %p239 = scmp.lt.s32.totalorder %s20, 1
        %s240 = scalar_select %p239, %s20, 1
        %s241 = smul.addr %s240, 8
        %s242 = scalar_lea.vmem %s1, %s241
        %p243 = scmp.lt.s32.totalorder %s20, 1
        %s244 = scalar_select %p243, %s20, 1
        %s245 = scalar_lea.vmem %s3, %s244
        %p246 = scmp.lt.s32.totalorder %s20, 1
        %s247 = scalar_select %p246, %s20, 1
        %s248 = scalar_lea.vmem %s4, %s247
        %s249 = sld [smem:[#allocation2]]
        %v250 = vld [vmem:[%s242] sm:$0xff]
        %v251 = vld [vmem:[%s2] sm:$0xff]
        %253 = vset.pattern.permute.xlu0 0
        %254 = vperm.xlu0 %253, %v251
        %v255 = vpop.permute.xlu0 %254
        %v257 = vmul.f32 %v250, %v255
        %v258 = vrot.slane %v257, 4
        %v259 = vadd.f32 %v257, %v258
        %v260 = vrot.slane %v259, 2
        %v261 = vadd.f32 %v259, %v260
        %v262 = vrot.slane %v261, 1
        %v263 = vadd.f32 %v261, %v262
        %v264 = vmul.f32 %v257, %v257
        %v265 = vrot.slane %v264, 4
        %v266 = vadd.f32 %v264, %v265
        %v267 = vrot.slane %v266, 2
        %v268 = vadd.f32 %v266, %v267
        %v269 = vrot.slane %v268, 1
        %v270 = vadd.f32 %v268, %v269
        %v271 = vstv %s249
        %v272 = vmul.f32 %v263, %v271
        %v273 = vmul.f32 %v270, %v271
        %v274 = vmul.f32 %v272, %v272
        %v275 = vsub.f32 %v273, %v274
        %v276 = vmax.f32 %v275, 0.0
        %v277 = vadd.f32 %v276, 1e-05
        %v278 = vrsqrt.pop %v277
        %v279 = vld [vmem:[%s245] sm:$0x1]
        %v280 = vmul.f32 %v278, %v279
        %v281 = vld [vmem:[%s248] sm:$0x1]
        %v282 = vmul.f32 %v272, %v280
        %v283 = vsub.f32 %v281, %v282
        %v284 = vlaneseq
        %v285 = vshrl.u32 %v284, 7
        %v286 = vsub.s32 0, %v285
        %v287 = vrot.slane %v280, %v286
        %v288 = vmul.f32 %v250, %v287
        %v290 = vlaneseq
        %v291 = vshrl.u32 %v290, 7
        %v292 = vsub.s32 0, %v291
        %v293 = vrot.slane %v283, %v292
        %v295 = vadd.f32 %v288, %v293
        %v296 = vmul.f32 %v295, %v255
        %297 = vst [vmem:[%s238] sm:$0xff] %v296
        %s298 = sand.u32 %s148, 1
        %s299 = scalar_lea.sflag [#allocation4], %s298
        %s300 = sand.u32 %s148, 1
        %s301 = smul.addr %s300, 8
        %s302 = scalar_lea.vmem [#allocation3], %s301
        // Predicated region
        $region41: #{masked_batch_norm_1d.1} parent=39 // pred_check
          %p303 = pneg %p158
        $region42: #{masked_batch_norm_1d.1} parent=39 // pred_check_branch
          %305 = sbr.rel (%p303) target = $region44
        $region43: #{masked_batch_norm_1d.1} parent=39 // pred_region
          %s307 = ssub.s32 128, 128
          %308 = vsyncadd %s299, %s307
          %s309 = smul.addr %s20, 128
          %s310 = scalar_lea.hbm %s5, %s309
          %s312 = sshll.u32 %s302, 4
          %s313 = int_to_ptr.vmem [resolvable:$true] %s312
          %315 = dma.vmem_to_hbm [thread:$0]  %s313, 128, %s310, %s299
        $region44: #{masked_batch_norm_1d.1} parent=39 // pred_fallthru
          _
      $region40: #{masked_batch_norm_1d.1} parent=5 // pred_fallthru
        _
      %p316 = scmp.le.s32.totalorder 2, %s15
      // Predicated region
      $region45: #{masked_batch_norm_1d.1} parent=5 // pred_check
        %p317 = pneg %p316
      $region46: #{masked_batch_norm_1d.1} parent=5 // pred_check_branch
        %319 = sbr.rel (%p317) target = $region48
      $region47: #{masked_batch_norm_1d.1} parent=5 // pred_region
        %s320 = ssub.s32 %s15, 2
        // Predicated region
        $region49: #{masked_batch_norm_1d.1} parent=47 // pred_check
          %p321 = pneg %p164
        $region50: #{masked_batch_norm_1d.1} parent=47 // pred_check_branch
          %323 = sbr.rel (%p321) target = $region52
        $region51: #{masked_batch_norm_1d.1} parent=47 // pred_region
          %s324 = sand.u32 %s149, 1
          %s325 = scalar_lea.sflag [#allocation4], %s324
          %s326 = sand.u32 %s149, 1
          %s327 = smul.addr %s326, 8
          %s328 = scalar_lea.vmem [#allocation3], %s327
          %329 = dma.done %s325, 128
        $region52: #{masked_batch_norm_1d.1} parent=47 // pred_fallthru
          _
      $region48: #{masked_batch_norm_1d.1} parent=5 // pred_fallthru
        _
    $region6: #{masked_batch_norm_1d.1} parent=1 // loop_footer
      %s19 = sadd.s32 1, %s15
    $region7: #{masked_batch_norm_1d.1} parent=1 // loop_footer_branch
      %14 = sbr.rel target = $region3
    $region8: #{masked_batch_norm_1d.1} parent=1 // loop_exit
      _
    %330 = vsyncpa [#allocation4], 1
    %s331 = scalar_lea.sflag [#allocation4], 1
    %332 = vsyncpa %s331, 1

</llo_original>
